<compile_context>
chip_gen: v5e
topology: v5e:2x2
jax: 0.10.0
libtpu: 0.0.40
codegen_flags: <defaults>
</compile_context>

<pallas_src>
import jax
import jax.numpy as jnp
from jax.experimental import pallas as pl
from jax.experimental.pallas import tpu as pltpu


def _round_up(x, m):
    return (x + m - 1) // m * m


# ----------------------------- Pallas kernel -------------------------------

def marc_kernel(feats_ref, wt_ref, omega_ref, bias_ref, out_ref):
    # feats_ref : (B, H)    bf16  pooled features (resident every grid step)
    # wt_ref    : (H, TV)   bf16  classifier weight tile (pre-transposed)
    # omega_ref : (1, TV)   f32   MARC omega
    # bias_ref  : (1, TV)   f32   precomputed beta * ||W_row||_2  (f32 norm)
    # out_ref   : (B, TV)   f32
    # classifier logits: feats @ W^T tile -> (B, TV); bf16 MXU, f32 accumulate
    logits = jnp.dot(feats_ref[...], wt_ref[...],
                     preferred_element_type=jnp.float32)
    # omega * logits + beta * w_norm   (bias already fused in the wrapper)
    out_ref[...] = (omega_ref[...] * logits
                    + bias_ref[...]).astype(out_ref.dtype)


# --------------------- once-per-weight-update preparation -------------------

def marc_prepare_weights(cls_w, omega, beta, *, tv=2048):
    """One-time prep (do this per weight update, NOT per forward).

    cls_w: (V, H) f32 classifier weight, omega/beta: (1, V) f32.
    Returns everything marc_forward needs: bf16 transposed/padded weight,
    padded omega, and the fused f32 bias = beta * ||W_row||_2.
    """
    V, H = cls_w.shape

    # Vocab tile: lane-aligned (>=128); prefer a multiple of 256 so it also
    # aligns with the 256-wide MXU on v6e/v7x; never wider than the padded V.
    v128 = _round_up(V, 128)
    tv = min(tv, v128)
    tv = (tv // 256) * 256 if tv >= 256 else 128
    Vp = _round_up(V, tv)
    pad = Vp - V

    cls_w32 = jnp.asarray(cls_w, jnp.float32)
    # Fidelity: norm over the original f32 weight, exactly as the PyTorch
    # module does (torch.norm(weight, dim=1)).
    w_norm = jnp.sqrt(jnp.sum(cls_w32 * cls_w32, axis=1))        # (V,)
    bias = jnp.asarray(beta, jnp.float32) * w_norm[None, :]      # (1, V)
    omega32 = jnp.asarray(omega, jnp.float32)                    # (1, V)
    wt = cls_w32.astype(jnp.bfloat16).T                          # (H, V)

    if pad:
        # Zero-pad so padded vocab columns produce exactly 0 (sliced off later).
        wt = jnp.pad(wt, ((0, 0), (0, pad)))
        omega32 = jnp.pad(omega32, ((0, 0), (0, pad)))
        bias = jnp.pad(bias, ((0, 0), (0, pad)))

    return {"wt": wt, "omega": omega32, "bias": bias,
            "V": V, "Vp": Vp, "tv": tv, "H": H}


# --------------------------------- forward ----------------------------------

def marc_forward(feats, prep):
    """feats: (B, H) -> (B, V) f32 MARC logits, using prepared weights."""
    B, H = feats.shape
    assert H == prep["H"]
    V, Vp, tv = prep["V"], prep["Vp"], prep["tv"]

    feats_b = jnp.asarray(feats, jnp.bfloat16)                   # (B, H)

    # Advisory cost hint: large memory-bound custom call (weight stream).
    cost = pl.CostEstimate(
        flops=2 * B * H * Vp,
        transcendentals=0,
        bytes_accessed=(H * Vp * 2          # bf16 W^T stream (dominant)
                        + B * H * 2         # bf16 feats
                        + 2 * Vp * 4        # f32 omega + bias
                        + B * Vp * 4))      # f32 output

    out = pl.pallas_call(
        marc_kernel,
        out_shape=jax.ShapeDtypeStruct((B, Vp), jnp.float32),
        grid_spec=pltpu.PrefetchScalarGridSpec(
            num_scalar_prefetch=0,
            grid=(Vp // tv,),
            in_specs=[
                pl.BlockSpec((B, H), lambda i: (0, 0)),    # feats (resident)
                pl.BlockSpec((H, tv), lambda i: (0, i)),   # W^T vocab tile
                pl.BlockSpec((1, tv), lambda i: (0, i)),   # omega tile
                pl.BlockSpec((1, tv), lambda i: (0, i)),   # bias tile
            ],
            out_specs=pl.BlockSpec((B, tv), lambda i: (0, i)),
        ),
        compiler_params=pltpu.CompilerParams(
            dimension_semantics=("parallel",),             # shards vocab over
        ),                                                 # v7x's 2 TCs
        cost_estimate=cost,
    )(feats_b, prep["wt"], prep["omega"], prep["bias"])

    return out[:, :V]


# ----------------------- tiny deterministic base model ---------------------

def init_params(key, *, C, S, H, V, tok_vocab):
    ks = jax.random.split(key, 6)
    return {
        "img_proj": jax.random.normal(ks[0], (C, H), jnp.float32) * 0.1,
        "tok_emb": jax.random.normal(ks[1], (tok_vocab, H), jnp.float32) * 0.1,
        "seg_emb": jax.random.normal(ks[2], (2, H), jnp.float32) * 0.1,
        # final classifier (the layer MARC reads: classifier[-1].weight)
        "cls_w": jax.random.normal(ks[3], (V, H), jnp.float32) * 0.05,
        # MARC parameters: init is ones/zeros in __init__; perturb slightly so
        # the omega and beta*w_norm paths are both exercised numerically.
        "omega": 1.0 + 0.1 * jax.random.normal(ks[4], (1, V), jnp.float32),
        "beta": 0.1 * jax.random.normal(ks[5], (1, V), jnp.float32),
    }


def tiny_feature_extractor(image, tokens, segment_ids, input_mask, params):
    # plain-JAX glue standing in for the black-box self.model backbone
    img_feat = jnp.mean(image, axis=(2, 3)) @ params["img_proj"]        # (B, H)
    tok_emb = params["tok_emb"][tokens]                                  # (B, S, H)
    m = input_mask[..., None].astype(jnp.float32)
    txt_feat = jnp.sum(tok_emb * m, axis=1) / jnp.maximum(
        jnp.sum(m, axis=1), 1.0)                                         # (B, H)
    seg_feat = jnp.mean(params["seg_emb"][segment_ids], axis=1)          # (B, H)
    return img_feat + txt_feat + seg_feat                                # (B, H)


def marc_reference(feats, cls_w, omega, beta):
    # Matmul at the kernel's precision (bf16 operands, f32 accumulate); norm
    # on the original f32 weight, exactly like the PyTorch module.
    f = feats.astype(jnp.bfloat16).astype(jnp.float32)
    w = cls_w.astype(jnp.bfloat16).astype(jnp.float32)
    logits = f @ w.T
    w32 = cls_w.astype(jnp.float32)
    w_norm = jnp.sqrt(jnp.sum(w32 * w32, axis=1))
    return omega * logits + beta * w_norm[None, :]


# ---------------------------------- main ------------------------------------

if __name__ == "__main__":
    B, C, HW, S = 2, 4, 16, 8        # batch, image channels, spatial, seq len
    H = 32                           # hidden dim of classifier input
    V = 1000                         # vocab size (30524 in the original); not a
                                     # multiple of 128 -> exercises padding path
    TOK_VOCAB = 64

    key = jax.random.PRNGKey(0)
    k_img, k_tok, k_seg, k_par = jax.random.split(key, 4)

    image = jax.random.normal(k_img, (B, C, HW, HW), jnp.float32)        # NCHW
    tokens = jax.random.randint(k_tok, (B, S), 0, TOK_VOCAB)
    segment_ids = jax.random.randint(k_seg, (B, S), 0, 2)
    input_mask = jnp.ones((B, S), jnp.int32)

    params = init_params(k_par, C=C, S=S, H=H, V=V, tok_vocab=TOK_VOCAB)

    # One-time weight prep (per weight update).  Production default tv=2048;
    # the demo uses tv=512 so the tiny V=1000 still exercises a multi-step
    # grid (2 vocab tiles) and the padding path.
    prep = marc_prepare_weights(params["cls_w"], params["omega"],
                                params["beta"], tv=512)

    feats = tiny_feature_extractor(image, tokens, segment_ids, input_mask, params)

    out = marc_forward(feats, prep)
    out = jax.block_until_ready(out)

    ref = marc_reference(feats, params["cls_w"], params["omega"], params["beta"])
    assert out.shape == (B, V)
    assert jnp.allclose(out, ref, atol=1e-4, rtol=1e-3), "mismatch vs reference"

    print("KERNEL_OK")
</pallas_src>

<mosaic_0001>
module attributes {stable_mosaic.version = 11 : i64} {
  func.func @marc_kernel(%arg0: i32, %arg1: memref<2x32xbf16, #tpu.memory_space<vmem>>, %arg2: memref<32x512xbf16, #tpu.memory_space<vmem>>, %arg3: memref<1x512xf32, #tpu.memory_space<vmem>>, %arg4: memref<1x512xf32, #tpu.memory_space<vmem>>, %arg5: memref<2x512xf32, #tpu.memory_space<vmem>>) attributes {dimension_semantics = [#tpu.dimension_semantics<parallel>], iteration_bounds = array<i64: 2>, scalar_prefetch = 0 : i64, scratch_operands = 0 : i64, tpu.core_type = #tpu.core_type<tc>, window_params = [{pipeline_mode = #tpu.pipeline_mode<synchronous>, transform_indices = @transform_0, window_bounds = array<i64: 2, 32>}, {transform_indices = @transform_1, window_bounds = array<i64: 32, 512>}, {transform_indices = @transform_2, window_bounds = array<i64: 1, 512>}, {transform_indices = @transform_3, window_bounds = array<i64: 1, 512>}, {transform_indices = @transform_4, window_bounds = array<i64: 2, 512>}]} {
    %c0 = arith.constant 0 : index
    %c0_0 = arith.constant 0 : index
    %0 = vector.load %arg1[%c0, %c0_0] : memref<2x32xbf16, #tpu.memory_space<vmem>>, vector<2x32xbf16>
    %c0_1 = arith.constant 0 : index
    %c0_2 = arith.constant 0 : index
    %1 = vector.load %arg2[%c0_1, %c0_2] : memref<32x512xbf16, #tpu.memory_space<vmem>>, vector<32x512xbf16>
    %cst = arith.constant dense<0.000000e+00> : vector<2x512xf32>
    %2 = tpu.matmul %0, %1, %cst {dimension_numbers = #tpu.dot_dimension_numbers<[1], [0], [0], [1], [0, 0, 1, 1], [], []>} : vector<2x32xbf16>, vector<32x512xbf16>, vector<2x512xf32> -> vector<2x512xf32>
    %c0_3 = arith.constant 0 : index
    %c0_4 = arith.constant 0 : index
    %3 = vector.load %arg3[%c0_3, %c0_4] : memref<1x512xf32, #tpu.memory_space<vmem>>, vector<1x512xf32>
    %4 = vector.broadcast %3 : vector<1x512xf32> to vector<2x512xf32>
    %5 = arith.mulf %4, %2 : vector<2x512xf32>
    %c0_5 = arith.constant 0 : index
    %c0_6 = arith.constant 0 : index
    %6 = vector.load %arg4[%c0_5, %c0_6] : memref<1x512xf32, #tpu.memory_space<vmem>>, vector<1x512xf32>
    %7 = vector.broadcast %6 : vector<1x512xf32> to vector<2x512xf32>
    %8 = arith.addf %5, %7 : vector<2x512xf32>
    %c0_7 = arith.constant 0 : index
    %c0_8 = arith.constant 0 : index
    %9 = vector.load %arg5[%c0_7, %c0_8] : memref<2x512xf32, #tpu.memory_space<vmem>>, vector<2x512xf32>
    tpu.vector_store %arg5[%c0_7, %c0_8], %8 {strides = array<i32>} : memref<2x512xf32, #tpu.memory_space<vmem>>, vector<2x512xf32>,
    return
  }
  func.func @transform_0(%arg0: i32) -> (i32, i32) {
    %c0_i32 = arith.constant 0 : i32
    %c0_i32_0 = arith.constant 0 : i32
    %c0_i32_1 = arith.constant 0 : i32
    return %c0_i32, %c0_i32_0 : i32, i32
  }
  func.func @transform_1(%arg0: i32) -> (i32, i32) {
    %c0_i32 = arith.constant 0 : i32
    %c0_i32_0 = arith.constant 0 : i32
    return %c0_i32, %arg0 : i32, i32
  }
  func.func @transform_2(%arg0: i32) -> (i32, i32) {
    %c0_i32 = arith.constant 0 : i32
    %c0_i32_0 = arith.constant 0 : i32
    return %c0_i32, %arg0 : i32, i32
  }
  func.func @transform_3(%arg0: i32) -> (i32, i32) {
    %c0_i32 = arith.constant 0 : i32
    %c0_i32_0 = arith.constant 0 : i32
    return %c0_i32, %arg0 : i32, i32
  }
  func.func @transform_4(%arg0: i32) -> (i32, i32) {
    %c0_i32 = arith.constant 0 : i32
    %c0_i32_0 = arith.constant 0 : i32
    return %c0_i32, %arg0 : i32, i32
  }
}

</mosaic_0001>

<llo_original>
// kernel: tpu_custom_call.1
$region0: #{tpu_custom_call.1}
  #allocation0 [shape = 'u32[]', space=smem, size = 0x4, offset = 0x4, fixed_abs, tag = 'smem constant byte address 0x4 - core index']
  #allocation1 [shape = 'u32[72,128]{1,0:T(1,128)}', space=vmem, size = 0x9000, scoped, tag = 'internal scratch']
  %s0 = inlined_call_operand.hbm [shape: bf16[2,32], index: 0, kind: input, shape index: {}]
  %s1 = inlined_call_operand.hbm [shape: bf16[32,1024], index: 1, kind: input, shape index: {}]
  %s2 = inlined_call_operand.hbm [shape: f32[1,1024], index: 2, kind: input, shape index: {}]
  %s3 = inlined_call_operand.hbm [shape: f32[1,1024], index: 3, kind: input, shape index: {}]
  %s4 = inlined_call_operand.hbm [shape: f32[2,1024], index: 4, kind: output, shape index: {}]
  %s5 = sld [smem:[#allocation0]]
  $region65: #{tpu_custom_call.1} parent=0
    _
  %s7 = ssub.s32 1, %s5
  %s8 = scalar_select 0, %s7, %s5
  $region1: #{tpu_custom_call.1} parent=0
    #allocation2 [shape = 'u8[512]{0}', space=vmem, size = 0x400, scoped, tag = 'input window, operand 0, single buffered']
    #allocation3 [shape = 's32[2]{0}', space=sflag, size = 0x8, scoped, tag = 'scoped memory for tpu_custom_call.1']
    #allocation4 [shape = 's32[2]{0}', space=sflag, size = 0x8, scoped, tag = 'scoped memory for tpu_custom_call.1']
    #allocation5 [shape = 'u8[65536]{0}', space=vmem, size = 0x10000, scoped, tag = 'input window, operand 1']
    #allocation6 [shape = 's32[2]{0}', space=sflag, size = 0x8, scoped, tag = 'scoped memory for tpu_custom_call.1']
    #allocation7 [shape = 'u8[4096]{0}', space=vmem, size = 0x1000, scoped, tag = 'input window, operand 2']
    #allocation8 [shape = 'u8[4096]{0}', space=vmem, size = 0x1000, scoped, tag = 'input window, operand 3']
    #allocation9 [shape = 's32[2]{0}', space=sflag, size = 0x8, scoped, tag = 'scoped memory for tpu_custom_call.1']
    #allocation10 [shape = 'u8[8192]{0}', space=vmem, size = 0x2000, scoped, tag = 'output window, operand 0']
    %9 = vsyncpa [#allocation3], 0
    %10 = vsyncpa [#allocation6], 0
    %s11 = scalar_lea.sflag [#allocation6], 1
    %12 = vsyncpa %s11, 0
    %13 = vsyncpa [#allocation9], 0
    %s14 = scalar_lea.sflag [#allocation9], 1
    %15 = vsyncpa %s14, 0
    %16 = vsyncpa [#allocation4], 0
    %s17 = scalar_lea.sflag [#allocation4], 1
    %18 = vsyncpa %s17, 0
    loop: start=0, step=1, limit=4
    $region2: #{tpu_custom_call.1} parent=1 // loop_pre_header
      _
    $region3: #{tpu_custom_call.1} parent=1 // loop_header
      %s20 = sphi 0, %s24
      %p21 = scmp.ge.s32.totalorder %s20, 4
      %s28 = sphi 0, %s28
      %s30 = sphi 0, %s28
      %s31 = sphi 0, %s30
      %s45 = sphi 0, %s31
      %s51 = sphi 0, %s53
      %s54 = sphi 0, %s51
      %s55 = sphi 0, %s54
      %s71 = sphi 0, %s55
      %s77 = sphi 0, %s79
      %s80 = sphi 0, %s77
      %s81 = sphi 0, %s80
      %s97 = sphi 0, %s81
      %s103 = sphi 0, %s105
      %s106 = sphi 0, %s103
      %s107 = sphi 0, %s106
      %s123 = sphi 0, %s107
      %s129 = sphi 0, %s131
      %s132 = sphi 0, %s129
      %s133 = sphi 0, %s132
      %s149 = sphi 0, %s133
    $region4: #{tpu_custom_call.1} parent=1 // loop_header_branch
      %23 = sbr.rel (%p21) target = $region8
    $region5: #{tpu_custom_call.1} parent=1 // loop_body
      %s25 = ssub.s32 %s20, 1
      %s26 = ssub.s32 %s20, 2
      %s27 = sadd.s32 %s20, 1
      %s29 = sadd.s32 %s28, 1
      %p32 = scmp.eq.s32.totalorder %s20, 1
      %p33 = scmp.ne.s32.totalorder %s28, %s30
      %p34 = scmp.eq.s32.totalorder %s20, 0
      %p35 = por %p33, %p34
      %p36 = scmp.ne.s32.totalorder %s28, %s30
      %p37 = scmp.eq.s32.totalorder %s25, 1
      %p38 = por %p36, %p37
      %p39 = scmp.ne.s32.totalorder %s30, %s31
      %p40 = scmp.eq.s32.totalorder %s25, 0
      %p41 = por %p39, %p40
      %p42 = scmp.ne.s32.totalorder %s30, %s31
      %p43 = scmp.eq.s32.totalorder %s26, 1
      %p44 = por %p42, %p43
      %p46 = scmp.ne.s32.totalorder %s31, %s45
      %p47 = scmp.eq.s32.totalorder %s26, 0
      %p48 = por %p46, %p47
      %s49 = ssub.s32 %s20, %s27
      %p50 = scmp.eq.s32.totalorder %s49, 0
      %s52 = sadd.s32 %s51, 1
      %s53 = scalar_select %p50, %s51, %s52
      %p56 = pneg %p50
      %p57 = scmp.eq.s32.totalorder %s20, 1
      %p58 = por %p56, %p57
      %p59 = scmp.ne.s32.totalorder %s51, %s54
      %p60 = scmp.eq.s32.totalorder %s20, 0
      %p61 = por %p59, %p60
      %p62 = scmp.ne.s32.totalorder %s51, %s54
      %p63 = scmp.eq.s32.totalorder %s25, 1
      %p64 = por %p62, %p63
      %p65 = scmp.ne.s32.totalorder %s54, %s55
      %p66 = scmp.eq.s32.totalorder %s25, 0
      %p67 = por %p65, %p66
      %p68 = scmp.ne.s32.totalorder %s54, %s55
      %p69 = scmp.eq.s32.totalorder %s26, 1
      %p70 = por %p68, %p69
      %p72 = scmp.ne.s32.totalorder %s55, %s71
      %p73 = scmp.eq.s32.totalorder %s26, 0
      %p74 = por %p72, %p73
      %s75 = ssub.s32 %s20, %s27
      %p76 = scmp.eq.s32.totalorder %s75, 0
      %s78 = sadd.s32 %s77, 1
      %s79 = scalar_select %p76, %s77, %s78
      %p82 = pneg %p76
      %p83 = scmp.eq.s32.totalorder %s20, 1
      %p84 = por %p82, %p83
      %p85 = scmp.ne.s32.totalorder %s77, %s80
      %p86 = scmp.eq.s32.totalorder %s20, 0
      %p87 = por %p85, %p86
      %p88 = scmp.ne.s32.totalorder %s77, %s80
      %p89 = scmp.eq.s32.totalorder %s25, 1
      %p90 = por %p88, %p89
      %p91 = scmp.ne.s32.totalorder %s80, %s81
      %p92 = scmp.eq.s32.totalorder %s25, 0
      %p93 = por %p91, %p92
      %p94 = scmp.ne.s32.totalorder %s80, %s81
      %p95 = scmp.eq.s32.totalorder %s26, 1
      %p96 = por %p94, %p95
      %p98 = scmp.ne.s32.totalorder %s81, %s97
      %p99 = scmp.eq.s32.totalorder %s26, 0
      %p100 = por %p98, %p99
      %s101 = ssub.s32 %s20, %s27
      %p102 = scmp.eq.s32.totalorder %s101, 0
      %s104 = sadd.s32 %s103, 1
      %s105 = scalar_select %p102, %s103, %s104
      %p108 = pneg %p102
      %p109 = scmp.eq.s32.totalorder %s20, 1
      %p110 = por %p108, %p109
      %p111 = scmp.ne.s32.totalorder %s103, %s106
      %p112 = scmp.eq.s32.totalorder %s20, 0
      %p113 = por %p111, %p112
      %p114 = scmp.ne.s32.totalorder %s103, %s106
      %p115 = scmp.eq.s32.totalorder %s25, 1
      %p116 = por %p114, %p115
      %p117 = scmp.ne.s32.totalorder %s106, %s107
      %p118 = scmp.eq.s32.totalorder %s25, 0
      %p119 = por %p117, %p118
      %p120 = scmp.ne.s32.totalorder %s106, %s107
      %p121 = scmp.eq.s32.totalorder %s26, 1
      %p122 = por %p120, %p121
      %p124 = scmp.ne.s32.totalorder %s107, %s123
      %p125 = scmp.eq.s32.totalorder %s26, 0
      %p126 = por %p124, %p125
      %s127 = ssub.s32 %s20, %s27
      %p128 = scmp.eq.s32.totalorder %s127, 0
      %s130 = sadd.s32 %s129, 1
      %s131 = scalar_select %p128, %s129, %s130
      %p134 = pneg %p128
      %p135 = scmp.eq.s32.totalorder %s20, 1
      %p136 = por %p134, %p135
      %p137 = scmp.ne.s32.totalorder %s129, %s132
      %p138 = scmp.eq.s32.totalorder %s20, 0
      %p139 = por %p137, %p138
      %p140 = scmp.ne.s32.totalorder %s129, %s132
      %p141 = scmp.eq.s32.totalorder %s25, 1
      %p142 = por %p140, %p141
      %p143 = scmp.ne.s32.totalorder %s132, %s133
      %p144 = scmp.eq.s32.totalorder %s25, 0
      %p145 = por %p143, %p144
      %p146 = scmp.ne.s32.totalorder %s132, %s133
      %p147 = scmp.eq.s32.totalorder %s26, 1
      %p148 = por %p146, %p147
      %p150 = scmp.ne.s32.totalorder %s133, %s149
      %p151 = scmp.eq.s32.totalorder %s26, 0
      %p152 = por %p150, %p151
      %p153 = scmp.le.s32.totalorder 1, %s20
      %p154 = scmp.lt.s32.totalorder %s20, 3
      %p155 = pnand %p153, %p154
      %p156 = pneg %p155
      // Predicated region
      $region9: #{tpu_custom_call.1} parent=5 // pred_check
        _
      $region10: #{tpu_custom_call.1} parent=5 // pred_check_branch
        %158 = sbr.rel (%p155) target = $region12
      $region11: #{tpu_custom_call.1} parent=5 // pred_region
        %s159 = ssub.s32 %s20, 1
        // Predicated region
        $region13: #{tpu_custom_call.1} parent=11 // pred_check
          %p160 = pneg %p41
        $region14: #{tpu_custom_call.1} parent=11 // pred_check_branch
          %162 = sbr.rel (%p160) target = $region16
        $region15: #{tpu_custom_call.1} parent=11 // pred_region
          %164 = vsyncadd [#allocation3], 0
          %s166 = sshll.u32 %s0, 4
          %s167 = int_to_ptr.hbm [resolvable:$true] %s166
          %s168 = sshll.u32 [#allocation2], 4
          %s169 = int_to_ptr.vmem [resolvable:$true] %s168
          %171 = dma.hbm_to_vmem [thread:$0]  %s167, 16, %s169, [#allocation3]
        $region16: #{tpu_custom_call.1} parent=11 // pred_fallthru
          _
      $region12: #{tpu_custom_call.1} parent=5 // pred_fallthru
        _
      %p172 = scmp.lt.s32.totalorder %s20, 2
      // Predicated region
      $region17: #{tpu_custom_call.1} parent=5 // pred_check
        %p173 = pneg %p172
      $region18: #{tpu_custom_call.1} parent=5 // pred_check_branch
        %175 = sbr.rel (%p173) target = $region20
      $region19: #{tpu_custom_call.1} parent=5 // pred_region
        // Predicated region
        $region21: #{tpu_custom_call.1} parent=19 // pred_check
          %p176 = pneg %p61
        $region22: #{tpu_custom_call.1} parent=19 // pred_check_branch
          %178 = sbr.rel (%p176) target = $region24
        $region23: #{tpu_custom_call.1} parent=19 // pred_region
          %s179 = sand.u32 %s20, 1
          %s180 = scalar_lea.sflag [#allocation6], %s179
          %s181 = sand.u32 %s51, 1
          %s182 = smul.addr %s181, 64
          %s183 = scalar_lea.vmem [#allocation5], %s182
          %s184 = smul.u32 4, %s20
          %186 = vsyncadd %s180, 0
          %s187 = smul.addr %s184, 4
          %s188 = scalar_lea.hbm %s1, %s187
          %s189 = sshll.u32 %s188, 4
          %s190 = int_to_ptr.hbm [resolvable:$true] %s189
          %s191 = sshll.u32 %s183, 4
          %s192 = int_to_ptr.vmem [resolvable:$true] %s191
          %197 = dma.hbm_to_vmem [thread:$0]  %s190, 1024, %s192, %s180, 512, 256, 16
        $region24: #{tpu_custom_call.1} parent=19 // pred_fallthru
          _
        // Predicated region
        $region25: #{tpu_custom_call.1} parent=19 // pred_check
          %p198 = pneg %p87
        $region26: #{tpu_custom_call.1} parent=19 // pred_check_branch
          %200 = sbr.rel (%p198) target = $region28
        $region27: #{tpu_custom_call.1} parent=19 // pred_region
          %s201 = sand.u32 %s20, 1
          %s202 = scalar_lea.sflag [#allocation6], %s201
          %s203 = sand.u32 %s77, 1
          %s204 = smul.addr %s203, 4
          %s205 = scalar_lea.vmem [#allocation7], %s204
          %s206 = smul.u32 4, %s20
          %208 = vsyncadd %s202, 0
          %s209 = scalar_lea.hbm %s2, %s206
          %s211 = sshll.u32 %s209, 4
          %s212 = int_to_ptr.hbm [resolvable:$true] %s211
          %s213 = sshll.u32 %s205, 4
          %s214 = int_to_ptr.vmem [resolvable:$true] %s213
          %216 = dma.hbm_to_vmem [thread:$0]  %s212, 64, %s214, %s202
        $region28: #{tpu_custom_call.1} parent=19 // pred_fallthru
          _
        // Predicated region
        $region29: #{tpu_custom_call.1} parent=19 // pred_check
          %p217 = pneg %p113
        $region30: #{tpu_custom_call.1} parent=19 // pred_check_branch
          %219 = sbr.rel (%p217) target = $region32
        $region31: #{tpu_custom_call.1} parent=19 // pred_region
          %s220 = sand.u32 %s103, 1
          %s221 = scalar_lea.sflag [#allocation9], %s220
          %s222 = sand.u32 %s103, 1
          %s223 = smul.addr %s222, 4
          %s224 = scalar_lea.vmem [#allocation8], %s223
          %s225 = smul.u32 4, %s20
          %227 = vsyncadd %s221, 0
          %s228 = scalar_lea.hbm %s3, %s225
          %s230 = sshll.u32 %s228, 4
          %s231 = int_to_ptr.hbm [resolvable:$true] %s230
          %s232 = sshll.u32 %s224, 4
          %s233 = int_to_ptr.vmem [resolvable:$true] %s232
          %235 = dma.hbm_to_vmem [thread:$0]  %s231, 64, %s233, %s221
        $region32: #{tpu_custom_call.1} parent=19 // pred_fallthru
          _
      $region20: #{tpu_custom_call.1} parent=5 // pred_fallthru
        _
      %p236 = scmp.le.s32.totalorder 1, %s20
      %p237 = scmp.lt.s32.totalorder %s20, 3
      %p238 = pnand %p236, %p237
      %p239 = pneg %p238
      // Predicated region
      $region33: #{tpu_custom_call.1} parent=5 // pred_check
        _
      $region34: #{tpu_custom_call.1} parent=5 // pred_check_branch
        %241 = sbr.rel (%p238) target = $region36
      $region35: #{tpu_custom_call.1} parent=5 // pred_region
        %s242 = ssub.s32 %s20, 1
        // Predicated region
        $region37: #{tpu_custom_call.1} parent=35 // pred_check
          %p243 = pneg %p41
        $region38: #{tpu_custom_call.1} parent=35 // pred_check_branch
          %245 = sbr.rel (%p243) target = $region40
        $region39: #{tpu_custom_call.1} parent=35 // pred_region
          %247 = dma.done [#allocation3], 16
        $region40: #{tpu_custom_call.1} parent=35 // pred_fallthru
          _
        %s248 = sand.u32 %s25, 1
        %s249 = scalar_lea.sflag [#allocation6], %s248
        %s250 = sand.u32 %s54, 1
        %s251 = smul.addr %s250, 64
        %s252 = scalar_lea.vmem [#allocation5], %s251
        // Predicated region
        $region41: #{tpu_custom_call.1} parent=35 // pred_check
          %p253 = pneg %p67
        $region42: #{tpu_custom_call.1} parent=35 // pred_check_branch
          %255 = sbr.rel (%p253) target = $region44
        $region43: #{tpu_custom_call.1} parent=35 // pred_region
          %257 = dma.done %s249, 1024
        $region44: #{tpu_custom_call.1} parent=35 // pred_fallthru
          _
        %s258 = sand.u32 %s25, 1
        %s259 = scalar_lea.sflag [#allocation6], %s258
        %s260 = sand.u32 %s80, 1
        %s261 = smul.addr %s260, 4
        %s262 = scalar_lea.vmem [#allocation7], %s261
        // Predicated region
        $region45: #{tpu_custom_call.1} parent=35 // pred_check
          %p263 = pneg %p93
        $region46: #{tpu_custom_call.1} parent=35 // pred_check_branch
          %265 = sbr.rel (%p263) target = $region48
        $region47: #{tpu_custom_call.1} parent=35 // pred_region
          %267 = dma.done %s259, 64
        $region48: #{tpu_custom_call.1} parent=35 // pred_fallthru
          _
        %s268 = sand.u32 %s106, 1
        %s269 = scalar_lea.sflag [#allocation9], %s268
        %s270 = sand.u32 %s106, 1
        %s271 = smul.addr %s270, 4
        %s272 = scalar_lea.vmem [#allocation8], %s271
        // Predicated region
        $region49: #{tpu_custom_call.1} parent=35 // pred_check
          %p273 = pneg %p119
        $region50: #{tpu_custom_call.1} parent=35 // pred_check_branch
          %275 = sbr.rel (%p273) target = $region52
        $region51: #{tpu_custom_call.1} parent=35 // pred_region
          %277 = dma.done %s269, 64
        $region52: #{tpu_custom_call.1} parent=35 // pred_fallthru
          _
        %p278 = pneg %p41
        %p279 = pneg %p38
        %s280 = sand.u32 %s25, 1
        %s281 = scalar_lea.sflag [#allocation6], %s280
        %s282 = sand.u32 %s54, 1
        %s283 = smul.addr %s282, 64
        %s284 = scalar_lea.vmem [#allocation5], %s283
        %p285 = pneg %p67
        %p286 = pneg %p64
        %s287 = sand.u32 %s25, 1
        %s288 = scalar_lea.sflag [#allocation6], %s287
        %s289 = sand.u32 %s80, 1
        %s290 = smul.addr %s289, 4
        %s291 = scalar_lea.vmem [#allocation7], %s290
        %p292 = pneg %p93
        %p293 = pneg %p90
        %s294 = sand.u32 %s106, 1
        %s295 = scalar_lea.sflag [#allocation9], %s294
        %s296 = sand.u32 %s106, 1
        %s297 = smul.addr %s296, 4
        %s298 = scalar_lea.vmem [#allocation8], %s297
        %p299 = pneg %p119
        %p300 = pneg %p116
        %p301 = pneg %p145
        %p302 = pneg %p142
        %s303 = sand.u32 %s132, 1
        %s304 = scalar_lea.sflag [#allocation4], %s303
        %s305 = sand.u32 %s132, 1
        %s306 = smul.addr %s305, 8
        %s307 = scalar_lea.vmem [#allocation10], %s306
        %s308 = smul.u32 4, %s25
        %s309 = smul.u32 4, %s25
        %s310 = smul.u32 4, %s25
        %s311 = smul.u32 4, %s25
        %v313 = vld [vmem:[#allocation2] sm:$0x1]
        %v314 = vld [vmem:[%s252] sm:$0xff]
        %v315 = vld [vmem:[%s252 + $0x8] sm:$0xff]
        %v316 = vld [vmem:[%s252 + $0x10] sm:$0xff]
        %v317 = vld [vmem:[%s252 + $0x18] sm:$0xff]
        %v318 = vld [vmem:[%s252 + $0x20] sm:$0xff]
        %v319 = vld [vmem:[%s252 + $0x28] sm:$0xff]
        %v320 = vld [vmem:[%s252 + $0x30] sm:$0xff]
        %v321 = vld [vmem:[%s252 + $0x38] sm:$0xff]
        %v330 = vunpack.c.l.b16 %v314
        %v331 = vunpack.c.h.b16 %v314
        %v332 = vunpack.c.l.b16 %v315
        %v333 = vunpack.c.h.b16 %v315
        %v334 = vunpack.c.l.b16 %v316
        %v335 = vunpack.c.h.b16 %v316
        %v336 = vunpack.c.l.b16 %v317
        %v337 = vunpack.c.h.b16 %v317
        %v338 = vunpack.c.l.b16 %v318
        %v339 = vunpack.c.h.b16 %v318
        %v340 = vunpack.c.l.b16 %v319
        %v341 = vunpack.c.h.b16 %v319
        %v342 = vunpack.c.l.b16 %v320
        %v343 = vunpack.c.h.b16 %v320
        %v344 = vunpack.c.l.b16 %v321
        %v345 = vunpack.c.h.b16 %v321
        %v346 = vpack.c.b16 %v334, %v330
        %v347 = vpack.c.b16 %v335, %v331
        %v348 = vpack.c.b16 %v336, %v332
        %v349 = vpack.c.b16 %v337, %v333
        %v350 = vpack.c.b16 %v342, %v338
        %v351 = vpack.c.b16 %v343, %v339
        %v352 = vpack.c.b16 %v344, %v340
        %v353 = vpack.c.b16 %v345, %v341
        %vm362 = vcmask 261120
        %v364 = vsel %vm362, %v313, 0
        %366 = vmatpush.bf16.msra.mxu0 0
        %367 = vmatpush.bf16.msra.mxu0 0
        %368 = vmatpush.bf16.msra.mxu0 0
        %369 = vmatpush.bf16.msra.mxu0 0
        %370 = vmatpush.bf16.msra.mxu0 0
        %371 = vmatpush.bf16.msra.mxu0 0
        %372 = vmatpush.bf16.msra.mxu0 %v350
        %373 = vmatpush.bf16.msra.mxu0 %v346
        %374 = vmatmul.bf16.gmra.mxu0 %v364
        %v375 = vpop.f32.mrf.mxu0
        %v376 = vadd.f32 0.0, %v375
        %v377 = vpop.f32.mrf.mxu0
        %378 = vdwg.mxu0
        %379 = vmatpush.bf16.msra.mxu0 0
        %380 = vmatpush.bf16.msra.mxu0 0
        %381 = vmatpush.bf16.msra.mxu0 0
        %382 = vmatpush.bf16.msra.mxu0 0
        %383 = vmatpush.bf16.msra.mxu0 0
        %384 = vmatpush.bf16.msra.mxu0 0
        %385 = vmatpush.bf16.msra.mxu0 %v351
        %386 = vmatpush.bf16.msra.mxu0 %v347
        %387 = vmatmul.bf16.gmra.mxu0 %v364
        %v388 = vpop.f32.mrf.mxu0
        %v389 = vadd.f32 0.0, %v388
        %v390 = vpop.f32.mrf.mxu0
        %391 = vdwg.mxu0
        %392 = vmatpush.bf16.msra.mxu0 0
        %393 = vmatpush.bf16.msra.mxu0 0
        %394 = vmatpush.bf16.msra.mxu0 0
        %395 = vmatpush.bf16.msra.mxu0 0
        %396 = vmatpush.bf16.msra.mxu0 0
        %397 = vmatpush.bf16.msra.mxu0 0
        %398 = vmatpush.bf16.msra.mxu0 %v352
        %399 = vmatpush.bf16.msra.mxu0 %v348
        %400 = vmatmul.bf16.gmra.mxu0 %v364
        %v401 = vpop.f32.mrf.mxu0
        %v402 = vadd.f32 0.0, %v401
        %v403 = vpop.f32.mrf.mxu0
        %404 = vdwg.mxu0
        %405 = vmatpush.bf16.msra.mxu0 0
        %406 = vmatpush.bf16.msra.mxu0 0
        %407 = vmatpush.bf16.msra.mxu0 0
        %408 = vmatpush.bf16.msra.mxu0 0
        %409 = vmatpush.bf16.msra.mxu0 0
        %410 = vmatpush.bf16.msra.mxu0 0
        %411 = vmatpush.bf16.msra.mxu0 %v353
        %412 = vmatpush.bf16.msra.mxu0 %v349
        %413 = vmatmul.bf16.gmra.mxu0 %v364
        %v414 = vpop.f32.mrf.mxu0
        %v415 = vadd.f32 0.0, %v414
        %v416 = vpop.f32.mrf.mxu0
        %417 = vdwg.mxu0
        %v418 = vld [vmem:[%s262] sm:$0xf]
        %v420 = vperm.slane %v418, 0
        %v421 = vperm.slane %v418, 1
        %v422 = vperm.slane %v418, 2
        %v423 = vperm.slane %v418, 3
        %v428 = vmul.f32 %v420, %v376
        %v429 = vmul.f32 %v421, %v389
        %v430 = vmul.f32 %v422, %v402
        %v431 = vmul.f32 %v423, %v415
        %v432 = vld [vmem:[%s272] sm:$0xf]
        %v434 = vperm.slane %v432, 0
        %v435 = vperm.slane %v432, 1
        %v436 = vperm.slane %v432, 2
        %v437 = vperm.slane %v432, 3
        %v442 = vadd.f32 %v428, %v434
        %v443 = vadd.f32 %v429, %v435
        %v444 = vadd.f32 %v430, %v436
        %v445 = vadd.f32 %v431, %v437
        %v450 = vrot.slane %v443, 6
        %v451 = vrot.slane %v444, 4
        %v452 = vrot.slane %v445, 2
        %vm453 = vcmask 1041408
        %v454 = vsel %vm453, %v442, %v450
        %vm455 = vcmask 1045508
        %v456 = vsel %vm455, %v451, %v452
        %vm457 = vcmask 1043456
        %v458 = vsel %vm457, %v454, %v456
        %460 = vst [vmem:[%s307] sm:$0xff] %v458
        %s461 = sand.u32 %s132, 1
        %s462 = scalar_lea.sflag [#allocation4], %s461
        %s463 = sand.u32 %s132, 1
        %s464 = smul.addr %s463, 8
        %s465 = scalar_lea.vmem [#allocation10], %s464
        // Predicated region
        $region53: #{tpu_custom_call.1} parent=35 // pred_check
          %p466 = pneg %p142
        $region54: #{tpu_custom_call.1} parent=35 // pred_check_branch
          %468 = sbr.rel (%p466) target = $region56
        $region55: #{tpu_custom_call.1} parent=35 // pred_region
          %s469 = smul.u32 4, %s25
          %471 = vsyncadd %s462, 0
          %s472 = smul.addr %s469, 2
          %s473 = scalar_lea.hbm %s4, %s472
          %s475 = sshll.u32 %s465, 4
          %s476 = int_to_ptr.vmem [resolvable:$true] %s475
          %s477 = sshll.u32 %s473, 4
          %s478 = int_to_ptr.hbm [resolvable:$true] %s477
          %480 = dma.vmem_to_hbm [thread:$0]  %s476, 128, %s478, %s462
        $region56: #{tpu_custom_call.1} parent=35 // pred_fallthru
          _
      $region36: #{tpu_custom_call.1} parent=5 // pred_fallthru
        _
      %p481 = scmp.le.s32.totalorder 2, %s20
      // Predicated region
      $region57: #{tpu_custom_call.1} parent=5 // pred_check
        %p482 = pneg %p481
      $region58: #{tpu_custom_call.1} parent=5 // pred_check_branch
        %484 = sbr.rel (%p482) target = $region60
      $region59: #{tpu_custom_call.1} parent=5 // pred_region
        %s485 = ssub.s32 %s20, 2
        // Predicated region
        $region61: #{tpu_custom_call.1} parent=59 // pred_check
          %p486 = pneg %p148
        $region62: #{tpu_custom_call.1} parent=59 // pred_check_branch
          %488 = sbr.rel (%p486) target = $region64
        $region63: #{tpu_custom_call.1} parent=59 // pred_region
          %s489 = sand.u32 %s133, 1
          %s490 = scalar_lea.sflag [#allocation4], %s489
          %s491 = sand.u32 %s133, 1
          %s492 = smul.addr %s491, 8
          %s493 = scalar_lea.vmem [#allocation10], %s492
          %495 = dma.done %s490, 128
        $region64: #{tpu_custom_call.1} parent=59 // pred_fallthru
          _
      $region60: #{tpu_custom_call.1} parent=5 // pred_fallthru
        _
    $region6: #{tpu_custom_call.1} parent=1 // loop_footer
      %s24 = sadd.s32 1, %s20
    $region7: #{tpu_custom_call.1} parent=1 // loop_footer_branch
      %19 = sbr.rel target = $region3
    $region8: #{tpu_custom_call.1} parent=1 // loop_exit
      _
    %496 = vsyncpa [#allocation3], 1
    %s497 = scalar_lea.sflag [#allocation3], 1
    %498 = vsyncpa %s497, 1
    %499 = vsyncpa [#allocation6], 1
    %s500 = scalar_lea.sflag [#allocation6], 1
    %501 = vsyncpa %s500, 1
    %502 = vsyncpa [#allocation9], 1
    %s503 = scalar_lea.sflag [#allocation9], 1
    %504 = vsyncpa %s503, 1
    %505 = vsyncpa [#allocation4], 1
    %s506 = scalar_lea.sflag [#allocation4], 1
    %507 = vsyncpa %s506, 1

</llo_original>
